<compile_context>
chip_gen: v7x
topology: tpu7x:2x2x1
jax: 0.10.0
libtpu: 0.0.40
codegen_flags: <defaults>
</compile_context>

<pallas_src>
import jax
import jax.numpy as jnp
from jax.experimental import pallas as pl
from jax.experimental.pallas import tpu as pltpu

NEG_INF = -1e30  # finite "minus infinity": padded lanes never win max / make NaNs


def _round_up(x, m):
    return (x + m - 1) // m * m


# ----------------------------------------------------------------------------
# Kernel 1: out = log_softmax(x @ W + b, axis=-1), V tiled, online reduction.
#   grid = (M_tiles, V_tiles); output row-block (tile_m, V_pad) is resident in
#   VMEM across the V axis (index map ignores j) and written once at the last
#   V step, after the full log-sum-exp is known.
# ----------------------------------------------------------------------------
def _logprob_kernel(x_ref, w_ref, b_ref, o_ref, m_ref, l_ref, stash_ref):
    j = pl.program_id(1)
    n_v = stash_ref.shape[0]      # static: number of V tiles
    tv = w_ref.shape[1]           # static: V tile width (multiple of 128)

    @pl.when(j == 0)
    def _init():
        m_ref[...] = jnp.full_like(m_ref, NEG_INF)
        l_ref[...] = jnp.zeros_like(l_ref)

    # bf16 x bf16 on the MXU with f32 accumulation; bias add in f32.
    logits = jnp.dot(x_ref[...], w_ref[...],
                     preferred_element_type=jnp.float32) + b_ref[...]

    # Online (flash-style) log-sum-exp accumulation across V tiles.
    tile_max = jnp.max(logits, axis=-1, keepdims=True)
    m_new = jnp.maximum(m_ref[...], tile_max)
    l_ref[...] = (jnp.exp(m_ref[...] - m_new) * l_ref[...]
                  + jnp.sum(jnp.exp(logits - m_new), axis=-1, keepdims=True))
    m_ref[...] = m_new

    # Stash this tile's raw logits (dynamic index on the leading scratch dim).
    stash_ref[j] = logits

    @pl.when(j == n_v - 1)
    def _finalize():
        lse = m_ref[...] + jnp.log(l_ref[...])
        # Static unroll over V tiles: compile-time lane slices, unmasked stores.
        for t in range(n_v):
            o_ref[:, t * tv:(t + 1) * tv] = (
                stash_ref[t] - lse).astype(o_ref.dtype)


# ----------------------------------------------------------------------------
# Kernel 2 (greedy decode): ids = argmax_v (x @ W + b).
#   argmax(log_softmax(z)) == argmax(z): skip exp/log and write only (M,1) ids.
# ----------------------------------------------------------------------------
def _argmax_kernel(x_ref, w_ref, b_ref, ids_ref, bv_ref, bi_ref):
    j = pl.program_id(1)
    tv = w_ref.shape[1]

    @pl.when(j == 0)
    def _init():
        bv_ref[...] = jnp.full_like(bv_ref, NEG_INF)
        bi_ref[...] = jnp.zeros_like(bi_ref)

    logits = jnp.dot(x_ref[...], w_ref[...],
                     preferred_element_type=jnp.float32) + b_ref[...]

    tile_max = jnp.max(logits, axis=-1, keepdims=True)
    col = jax.lax.broadcasted_iota(jnp.int32, logits.shape, 1) + j * tv
    cand = jnp.where(logits == tile_max, col, jnp.int32(2 ** 31 - 1))
    tile_arg = jnp.min(cand, axis=-1, keepdims=True)   # first occurrence in tile

    better = tile_max > bv_ref[...]                    # strict: keep earlier tile on ties
    bi_ref[...] = jnp.where(better, tile_arg, bi_ref[...])
    bv_ref[...] = jnp.maximum(bv_ref[...], tile_max)

    @pl.when(j == pl.num_programs(1) - 1)
    def _finalize():
        ids_ref[...] = bi_ref[...]


# ----------------------------------------------------------------------------
# Wrappers: padding, bf16 casts, BlockSpecs / grid.
# ----------------------------------------------------------------------------
def _prep_operands(x2d, w, b, tile_m, tile_v):
    M, H = x2d.shape
    Hw, V = w.shape
    assert H == Hw
    # tile_m multiple of 16 (bf16 packs 16 sublanes/vreg); clamp tiles to the
    # padded problem so small inputs do not over-pad.
    tile_m = min(tile_m, _round_up(max(M, 1), 16))
    tile_v = min(tile_v, _round_up(V, 128))
    M_pad = _round_up(M, tile_m)
    V_pad = _round_up(V, tile_v)

    x_p = x2d.astype(jnp.bfloat16)
    if M_pad != M:
        x_p = jnp.pad(x_p, ((0, M_pad - M), (0, 0)))
    w_p = w.astype(jnp.bfloat16)
    b_p = b.astype(jnp.float32)
    if V_pad != V:
        w_p = jnp.pad(w_p, ((0, 0), (0, V_pad - V)))
        # Padded vocab columns get bias -1e30: they never win the max and
        # contribute ~0 to the softmax denominator.
        b_p = jnp.pad(b_p, ((0, 0), (0, V_pad - V)), constant_values=NEG_INF)
    return x_p, w_p, b_p, tile_m, tile_v, M_pad, V_pad


def logit_log_softmax(x2d, w, b, *, tile_m=256, tile_v=2048,
                      out_dtype=jnp.float32):
    """(M, H) @ (H, V) + b -> log_softmax over V, V-tiled online reduction."""
    M = x2d.shape[0]
    V = w.shape[1]
    x_p, w_p, b_p, tile_m, tile_v, M_pad, V_pad = _prep_operands(
        x2d, w, b, tile_m, tile_v)
    H = x_p.shape[1]
    n_v = V_pad // tile_v

    out = pl.pallas_call(
        _logprob_kernel,
        out_shape=jax.ShapeDtypeStruct((M_pad, V_pad), out_dtype),
        grid_spec=pltpu.PrefetchScalarGridSpec(
            num_scalar_prefetch=0,
            grid=(M_pad // tile_m, n_v),
            in_specs=[
                pl.BlockSpec((tile_m, H), lambda i, j: (i, 0)),
                pl.BlockSpec((H, tile_v), lambda i, j: (0, j)),
                pl.BlockSpec((1, tile_v), lambda i, j: (0, j)),
            ],
            # Resident row-block across the V sweep; written once at last j.
            out_specs=pl.BlockSpec((tile_m, V_pad), lambda i, j: (i, 0)),
            scratch_shapes=[
                pltpu.VMEM((tile_m, 1), jnp.float32),          # running max
                pltpu.VMEM((tile_m, 1), jnp.float32),          # running sum
                pltpu.VMEM((n_v, tile_m, tile_v), jnp.float32),  # raw logits
            ],
        ),
        compiler_params=pltpu.CompilerParams(
            dimension_semantics=("parallel", "arbitrary")),
    )(x_p, w_p, b_p)
    return out[:M, :V]


def logit_argmax(x2d, w, b, *, tile_m=256, tile_v=2048):
    """Greedy word ids: argmax_v (x @ W + b) without materializing (M, V)."""
    M = x2d.shape[0]
    x_p, w_p, b_p, tile_m, tile_v, M_pad, V_pad = _prep_operands(
        x2d, w, b, tile_m, tile_v)
    H = x_p.shape[1]

    ids = pl.pallas_call(
        _argmax_kernel,
        out_shape=jax.ShapeDtypeStruct((M_pad, 1), jnp.int32),
        grid_spec=pltpu.PrefetchScalarGridSpec(
            num_scalar_prefetch=0,
            grid=(M_pad // tile_m, V_pad // tile_v),
            in_specs=[
                pl.BlockSpec((tile_m, H), lambda i, j: (i, 0)),
                pl.BlockSpec((H, tile_v), lambda i, j: (0, j)),
                pl.BlockSpec((1, tile_v), lambda i, j: (0, j)),
            ],
            out_specs=pl.BlockSpec((tile_m, 1), lambda i, j: (i, 0)),
            scratch_shapes=[
                pltpu.VMEM((tile_m, 1), jnp.float32),  # best value
                pltpu.VMEM((tile_m, 1), jnp.int32),    # best index
            ],
        ),
        compiler_params=pltpu.CompilerParams(
            dimension_semantics=("parallel", "arbitrary")),
    )(x_p, w_p, b_p)
    return ids[:M, 0]


# ----------------------------------------------------------------------------
# CaptionModel: faithful dispatch semantics of the PyTorch base class.
# ----------------------------------------------------------------------------
class CaptionModel:
    def __init__(self, hidden_size, vocab_size, key, *, tile_m=256, tile_v=2048):
        k_w, k_b = jax.random.split(key)
        # Weights stored bf16 for the MXU / halved HBM weight stream.
        self.w = (jax.random.normal(k_w, (hidden_size, vocab_size),
                                    jnp.float32) * 0.02).astype(jnp.bfloat16)
        self.b = jax.random.normal(k_b, (1, vocab_size), jnp.float32) * 0.02
        self.tile_m = tile_m
        self.tile_v = tile_v

    # Mirrors: mode = kwargs.get('mode', 'forward'); del kwargs['mode'];
    #          return getattr(self, '_' + mode)(*args, **kwargs)
    def forward(self, *args, **kwargs):
        mode = kwargs.get('mode', 'forward')
        if 'mode' in kwargs:
            del kwargs['mode']
        return getattr(self, '_' + mode)(*args, **kwargs)

    __call__ = forward

    # TODO(synk): the base class defines no concrete _forward/_sample; these
    # implement the AttModel-style logit + log_softmax word head its
    # subclasses run per decoding step.
    def _forward(self, h):
        B, T, H = h.shape
        out2d = logit_log_softmax(h.reshape(B * T, H), self.w, self.b,
                                  tile_m=self.tile_m, tile_v=self.tile_v)
        return out2d.reshape(B, T, -1)

    def _sample(self, h):
        B, T, H = h.shape
        ids = logit_argmax(h.reshape(B * T, H), self.w, self.b,
                           tile_m=self.tile_m, tile_v=self.tile_v)
        return ids.reshape(B, T)


# ----------------------------------------------------------------------------
# Pure-JAX reference (same bf16 operand rounding as the kernel path).
# ----------------------------------------------------------------------------
def _ref_forward(h, w, b):
    x = h.astype(jnp.bfloat16).astype(jnp.float32)
    logits = jnp.einsum('bth,hv->btv', x, w.astype(jnp.float32)) + b[0]
    return jax.nn.log_softmax(logits, axis=-1)


if __name__ == "__main__":
    # Deliberately non-multiples: M = 2*7 = 14 rows (padded to 16),
    # vocab = 200 (padded to 256); tile_v=128 forces TWO V tiles so the
    # online-softmax reduction and padded-lane masking are exercised.
    batch, seq, hidden, vocab = 2, 7, 32, 200
    key = jax.random.PRNGKey(0)
    k_param, k_x = jax.random.split(key)

    model = CaptionModel(hidden, vocab, k_param, tile_v=128)
    h = jax.random.normal(k_x, (batch, seq, hidden), jnp.float32)

    # Dispatch exactly like the PyTorch module: mode kwarg -> _<mode>.
    out = jax.block_until_ready(model(h, mode='forward'))
    ref = _ref_forward(h, model.w, model.b)
    assert out.shape == (batch, seq, vocab)
    assert bool(jnp.all(jnp.isfinite(out)))
    assert float(jnp.max(jnp.abs(out - ref))) < 1e-3

    # Greedy-sample dispatch path (fused argmax kernel, no (M, V) writeback).
    ids = jax.block_until_ready(model(h, mode='sample'))
    assert ids.shape == (batch, seq)
    assert bool(jnp.all(ids == jnp.argmax(ref, axis=-1)))

    print("KERNEL_OK")
</pallas_src>

<mosaic_0001>
module attributes {stable_mosaic.version = 11 : i64} {
  func.func @_logprob_kernel(%arg0: i32, %arg1: i32, %arg2: memref<16x32xbf16, #tpu.memory_space<vmem>>, %arg3: memref<32x128xbf16, #tpu.memory_space<vmem>>, %arg4: memref<1x128xf32, #tpu.memory_space<vmem>>, %arg5: memref<16x256xf32, #tpu.memory_space<vmem>>, %arg6: memref<16x1xf32, #tpu.memory_space<vmem>>, %arg7: memref<16x1xf32, #tpu.memory_space<vmem>>, %arg8: memref<2x16x128xf32, #tpu.memory_space<vmem>>) attributes {dimension_semantics = [#tpu.dimension_semantics<parallel>, #tpu.dimension_semantics<arbitrary>], iteration_bounds = array<i64: 1, 2>, scalar_prefetch = 0 : i64, scratch_operands = 3 : i64, tpu.core_type = #tpu.core_type<tc>, window_params = [{transform_indices = @transform_0, window_bounds = array<i64: 16, 32>}, {transform_indices = @transform_1, window_bounds = array<i64: 32, 128>}, {transform_indices = @transform_2, window_bounds = array<i64: 1, 128>}, {transform_indices = @transform_3, window_bounds = array<i64: 16, 256>}]} {
    %c0_i32 = arith.constant 0 : i32
    %0 = arith.cmpi eq, %arg1, %c0_i32 : i32
    %1 = arith.extui %0 : i1 to i32
    %c0_i32_0 = arith.constant 0 : i32
    %2 = arith.cmpi ne, %1, %c0_i32_0 : i32
    scf.if %2 {
      %cst_21 = arith.constant -1.000000e+30 : f32
      %33 = vector.broadcast %cst_21 : f32 to vector<16x1xf32>
      %c0_22 = arith.constant 0 : index
      %c0_23 = arith.constant 0 : index
      %34 = vector.load %arg6[%c0_22, %c0_23] : memref<16x1xf32, #tpu.memory_space<vmem>>, vector<16x1xf32>
      tpu.vector_store %arg6[%c0_22, %c0_23], %33 {strides = array<i32>} : memref<16x1xf32, #tpu.memory_space<vmem>>, vector<16x1xf32>,
      %cst_24 = arith.constant 0.000000e+00 : f32
      %35 = vector.broadcast %cst_24 : f32 to vector<16x1xf32>
      %c0_25 = arith.constant 0 : index
      %c0_26 = arith.constant 0 : index
      %36 = vector.load %arg7[%c0_25, %c0_26] : memref<16x1xf32, #tpu.memory_space<vmem>>, vector<16x1xf32>
      tpu.vector_store %arg7[%c0_25, %c0_26], %35 {strides = array<i32>} : memref<16x1xf32, #tpu.memory_space<vmem>>, vector<16x1xf32>,
    } else {
    }
    %c0 = arith.constant 0 : index
    %c0_1 = arith.constant 0 : index
    %3 = vector.load %arg2[%c0, %c0_1] : memref<16x32xbf16, #tpu.memory_space<vmem>>, vector<16x32xbf16>
    %c0_2 = arith.constant 0 : index
    %c0_3 = arith.constant 0 : index
    %4 = vector.load %arg3[%c0_2, %c0_3] : memref<32x128xbf16, #tpu.memory_space<vmem>>, vector<32x128xbf16>
    %cst = arith.constant dense<0.000000e+00> : vector<16x128xf32>
    %5 = tpu.matmul %3, %4, %cst {dimension_numbers = #tpu.dot_dimension_numbers<[1], [0], [0], [1], [0, 0, 1, 1], [], []>} : vector<16x32xbf16>, vector<32x128xbf16>, vector<16x128xf32> -> vector<16x128xf32>
    %c0_4 = arith.constant 0 : index
    %c0_5 = arith.constant 0 : index
    %6 = vector.load %arg4[%c0_4, %c0_5] : memref<1x128xf32, #tpu.memory_space<vmem>>, vector<1x128xf32>
    %7 = vector.broadcast %6 : vector<1x128xf32> to vector<16x128xf32>
    %8 = arith.addf %5, %7 : vector<16x128xf32>
    %cst_6 = arith.constant dense<0xFF800000> : vector<16xf32>
    %9 = vector.multi_reduction <maximumf>, %8, %cst_6 [1] : vector<16x128xf32> to vector<16xf32>
    %10 = vector.shape_cast %9 : vector<16xf32> to vector<16x1xf32>
    %c0_7 = arith.constant 0 : index
    %c0_8 = arith.constant 0 : index
    %11 = vector.load %arg6[%c0_7, %c0_8] : memref<16x1xf32, #tpu.memory_space<vmem>>, vector<16x1xf32>
    %12 = arith.maximumf %11, %10 : vector<16x1xf32>
    %c0_9 = arith.constant 0 : index
    %c0_10 = arith.constant 0 : index
    %13 = vector.load %arg6[%c0_9, %c0_10] : memref<16x1xf32, #tpu.memory_space<vmem>>, vector<16x1xf32>
    %14 = arith.subf %13, %12 : vector<16x1xf32>
    %15 = math.exp %14 : vector<16x1xf32>
    %c0_11 = arith.constant 0 : index
    %c0_12 = arith.constant 0 : index
    %16 = vector.load %arg7[%c0_11, %c0_12] : memref<16x1xf32, #tpu.memory_space<vmem>>, vector<16x1xf32>
    %17 = arith.mulf %15, %16 : vector<16x1xf32>
    %18 = vector.broadcast %12 : vector<16x1xf32> to vector<16x128xf32>
    %19 = arith.subf %8, %18 : vector<16x128xf32>
    %20 = math.exp %19 : vector<16x128xf32>
    %cst_13 = arith.constant dense<0.000000e+00> : vector<16xf32>
    %21 = vector.multi_reduction <add>, %20, %cst_13 [1] : vector<16x128xf32> to vector<16xf32>
    %22 = vector.shape_cast %21 : vector<16xf32> to vector<16x1xf32>
    %23 = arith.addf %17, %22 : vector<16x1xf32>
    %c0_14 = arith.constant 0 : index
    %c0_15 = arith.constant 0 : index
    %24 = vector.load %arg7[%c0_14, %c0_15] : memref<16x1xf32, #tpu.memory_space<vmem>>, vector<16x1xf32>
    tpu.vector_store %arg7[%c0_14, %c0_15], %23 {strides = array<i32>} : memref<16x1xf32, #tpu.memory_space<vmem>>, vector<16x1xf32>,
    %c0_16 = arith.constant 0 : index
    %c0_17 = arith.constant 0 : index
    %25 = vector.load %arg6[%c0_16, %c0_17] : memref<16x1xf32, #tpu.memory_space<vmem>>, vector<16x1xf32>
    tpu.vector_store %arg6[%c0_16, %c0_17], %12 {strides = array<i32>} : memref<16x1xf32, #tpu.memory_space<vmem>>, vector<16x1xf32>,
    %26 = arith.index_cast %arg1 : i32 to index
    %c0_18 = arith.constant 0 : index
    %c0_19 = arith.constant 0 : index
    %27 = vector.load %arg8[%26, %c0_18, %c0_19] : memref<2x16x128xf32, #tpu.memory_space<vmem>>, vector<1x16x128xf32>
    %28 = vector.shape_cast %27 : vector<1x16x128xf32> to vector<16x128xf32>
    %29 = vector.shape_cast %8 : vector<16x128xf32> to vector<1x16x128xf32>
    tpu.vector_store %arg8[%26, %c0_18, %c0_19], %29 {strides = array<i32>} : memref<2x16x128xf32, #tpu.memory_space<vmem>>, vector<1x16x128xf32>,
    %c1_i32 = arith.constant 1 : i32
    %30 = arith.cmpi eq, %arg1, %c1_i32 : i32
    %31 = arith.extui %30 : i1 to i32
    %c0_i32_20 = arith.constant 0 : i32
    %32 = arith.cmpi ne, %31, %c0_i32_20 : i32
    scf.if %32 {
      %c0_21 = arith.constant 0 : index
      %c0_22 = arith.constant 0 : index
      %33 = vector.load %arg6[%c0_21, %c0_22] : memref<16x1xf32, #tpu.memory_space<vmem>>, vector<16x1xf32>
      %c0_23 = arith.constant 0 : index
      %c0_24 = arith.constant 0 : index
      %34 = vector.load %arg7[%c0_23, %c0_24] : memref<16x1xf32, #tpu.memory_space<vmem>>, vector<16x1xf32>
      %35 = math.log %34 : vector<16x1xf32>
      %36 = arith.addf %33, %35 : vector<16x1xf32>
      %c0_25 = arith.constant 0 : index
      %c0_26 = arith.constant 0 : index
      %c0_27 = arith.constant 0 : index
      %37 = vector.load %arg8[%c0_25, %c0_26, %c0_27] : memref<2x16x128xf32, #tpu.memory_space<vmem>>, vector<1x16x128xf32>
      %38 = vector.shape_cast %37 : vector<1x16x128xf32> to vector<16x128xf32>
      %39 = vector.broadcast %36 : vector<16x1xf32> to vector<16x128xf32>
      %40 = arith.subf %38, %39 : vector<16x128xf32>
      %c0_28 = arith.constant 0 : index
      %c0_29 = arith.constant 0 : index
      %41 = vector.load %arg5[%c0_28, %c0_29] : memref<16x256xf32, #tpu.memory_space<vmem>>, vector<16x128xf32>
      tpu.vector_store %arg5[%c0_28, %c0_29], %40 {strides = array<i32>} : memref<16x256xf32, #tpu.memory_space<vmem>>, vector<16x128xf32>,
      %c1 = arith.constant 1 : index
      %c0_30 = arith.constant 0 : index
      %c0_31 = arith.constant 0 : index
      %42 = vector.load %arg8[%c1, %c0_30, %c0_31] : memref<2x16x128xf32, #tpu.memory_space<vmem>>, vector<1x16x128xf32>
      %43 = vector.shape_cast %42 : vector<1x16x128xf32> to vector<16x128xf32>
      %44 = vector.broadcast %36 : vector<16x1xf32> to vector<16x128xf32>
      %45 = arith.subf %43, %44 : vector<16x128xf32>
      %c0_32 = arith.constant 0 : index
      %c128 = arith.constant 128 : index
      %46 = vector.load %arg5[%c0_32, %c128] : memref<16x256xf32, #tpu.memory_space<vmem>>, vector<16x128xf32>
      tpu.vector_store %arg5[%c0_32, %c128], %45 {strides = array<i32>} : memref<16x256xf32, #tpu.memory_space<vmem>>, vector<16x128xf32>,
    } else {
    }
    return
  }
  func.func @transform_0(%arg0: i32, %arg1: i32) -> (i32, i32) {
    %c0_i32 = arith.constant 0 : i32
    %c0_i32_0 = arith.constant 0 : i32
    return %arg0, %c0_i32 : i32, i32
  }
  func.func @transform_1(%arg0: i32, %arg1: i32) -> (i32, i32) {
    %c0_i32 = arith.constant 0 : i32
    %c0_i32_0 = arith.constant 0 : i32
    return %c0_i32, %arg1 : i32, i32
  }
  func.func @transform_2(%arg0: i32, %arg1: i32) -> (i32, i32) {
    %c0_i32 = arith.constant 0 : i32
    %c0_i32_0 = arith.constant 0 : i32
    return %c0_i32, %arg1 : i32, i32
  }
  func.func @transform_3(%arg0: i32, %arg1: i32) -> (i32, i32) {
    %c0_i32 = arith.constant 0 : i32
    %c0_i32_0 = arith.constant 0 : i32
    return %arg0, %c0_i32 : i32, i32
  }
}

</mosaic_0001>

<llo_original>
// kernel: tpu_custom_call.1
$region0: #{tpu_custom_call.1}
  #allocation0 [shape = 'u32[]', space=smem, size = 0x4, offset = 0x4, fixed_abs, tag = 'smem constant byte address 0x4 - core index']
  #allocation1 [shape = 'u32[144,128]{1,0:T(1,128)}', space=vmem, size = 0x12000, scoped, tag = 'internal scratch']
  #allocation2 [shape = 'f32[16,1]{1,0:T(8,128)}', space=vmem, size = 0x2000, scoped, tag = 'scratch operand']
  #allocation3 [shape = 'f32[16,1]{1,0:T(8,128)}', space=vmem, size = 0x2000, scoped, tag = 'scratch operand']
  #allocation4 [shape = 'f32[2,16,128]{2,1,0:T(8,128)}', space=vmem, size = 0x4000, scoped, tag = 'scratch operand']
  %s0 = inlined_call_operand.hbm [shape: bf16[16,32], index: 0, kind: input, shape index: {}]
  %s1 = inlined_call_operand.hbm [shape: bf16[32,256], index: 1, kind: input, shape index: {}]
  %s2 = inlined_call_operand.vmem [shape: f32[1,256], index: 2, kind: input, shape index: {}]
  %s3 = inlined_call_operand.hbm [shape: f32[16,256], index: 3, kind: output, shape index: {}]
  %s4 = sld [smem:[#allocation0]]
  $region61: #{tpu_custom_call.1} parent=0
    _
  %s6 = ssub.s32 1, %s4
  %s7 = scalar_select 0, %s6, %s4
  $region1: #{tpu_custom_call.1} parent=0
    #allocation5 [shape = 'u8[4096]{0}', space=vmem, size = 0x1000, scoped, tag = 'input window, operand 0, single buffered']
    #allocation6 [shape = 's32[2]{0}', space=sflag, size = 0x8, scoped, tag = 'scoped memory for tpu_custom_call.1']
    #allocation7 [shape = 's32[2]{0}', space=sflag, size = 0x8, scoped, tag = 'scoped memory for tpu_custom_call.1']
    #allocation8 [shape = 'u8[16384]{0}', space=vmem, size = 0x4000, scoped, tag = 'input window, operand 1']
    #allocation9 [shape = 's32[2]{0}', space=sflag, size = 0x8, scoped, tag = 'scoped memory for tpu_custom_call.1']
    #allocation10 [shape = 'u8[16384]{0}', space=vmem, size = 0x4000, scoped, tag = 'output window, operand 0, single buffered']
    %8 = vsyncpa [#allocation6], 0
    %9 = vsyncpa [#allocation9], 0
    %s10 = scalar_lea.sflag [#allocation9], 1
    %11 = vsyncpa %s10, 0
    %12 = vsyncpa [#allocation7], 0
    loop: start=0, step=1, limit=4
    $region2: #{tpu_custom_call.1} parent=1 // loop_pre_header
      _
    $region3: #{tpu_custom_call.1} parent=1 // loop_header
      %s14 = sphi 0, %s18
      %p15 = scmp.ge.s32.totalorder %s14, 4
      %s21 = sphi 0, %s33
      %s22 = sphi 0, %s29
      %s23 = sphi 0, %s21
      %s24 = sphi 0, %s22
      %s25 = sphi 0, %s23
      %s26 = sphi 0, %s24
      %s36 = sphi 0, %s38
      %s39 = sphi 0, %s36
      %s40 = sphi 0, %s39
      %s56 = sphi 0, %s40
      %s62 = sphi 0, %s64
      %s65 = sphi 0, %s62
      %s66 = sphi 0, %s65
      %s82 = sphi 0, %s66
      %s88 = sphi 0, %s90
      %s91 = sphi 0, %s88
      %s92 = sphi 0, %s91
      %s108 = sphi 0, %s92
      %s114 = sphi 0, %s116
      %s117 = sphi 0, %s114
      %s118 = sphi 0, %s117
      %s134 = sphi 0, %s118
    $region4: #{tpu_custom_call.1} parent=1 // loop_header_branch
      %17 = sbr.rel (%p15) target = $region8
    $region5: #{tpu_custom_call.1} parent=1 // loop_body
      %s19 = ssub.s32 %s14, 1
      %s20 = ssub.s32 %s14, 2
      %s27 = sadd.s32 1, %s22
      %p28 = scmp.ge.s32.totalorder %s27, 2
      %s29 = scalar_select %p28, 0, %s27
      %s30 = sadd.s32 1, %s21
      %s31 = scalar_select %p28, %s30, %s21
      %p32 = scmp.ge.s32.totalorder %s31, 1
      %s33 = scalar_select %p32, 0, %s31
      %s34 = ssub.s32 %s21, %s33
      %p35 = scmp.eq.s32.totalorder %s34, 0
      %s37 = sadd.s32 %s36, 1
      %s38 = scalar_select %p35, %s36, %s37
      %p41 = pneg %p35
      %p42 = scmp.eq.s32.totalorder %s14, 1
      %p43 = por %p41, %p42
      %p44 = scmp.ne.s32.totalorder %s36, %s39
      %p45 = scmp.eq.s32.totalorder %s14, 0
      %p46 = por %p44, %p45
      %p47 = scmp.ne.s32.totalorder %s36, %s39
      %p48 = scmp.eq.s32.totalorder %s19, 1
      %p49 = por %p47, %p48
      %p50 = scmp.ne.s32.totalorder %s39, %s40
      %p51 = scmp.eq.s32.totalorder %s19, 0
      %p52 = por %p50, %p51
      %p53 = scmp.ne.s32.totalorder %s39, %s40
      %p54 = scmp.eq.s32.totalorder %s20, 1
      %p55 = por %p53, %p54
      %p57 = scmp.ne.s32.totalorder %s40, %s56
      %p58 = scmp.eq.s32.totalorder %s20, 0
      %p59 = por %p57, %p58
      %s60 = ssub.s32 %s22, %s29
      %p61 = scmp.eq.s32.totalorder %s60, 0
      %s63 = sadd.s32 %s62, 1
      %s64 = scalar_select %p61, %s62, %s63
      %p67 = pneg %p61
      %p68 = scmp.eq.s32.totalorder %s14, 1
      %p69 = por %p67, %p68
      %p70 = scmp.ne.s32.totalorder %s62, %s65
      %p71 = scmp.eq.s32.totalorder %s14, 0
      %p72 = por %p70, %p71
      %p73 = scmp.ne.s32.totalorder %s62, %s65
      %p74 = scmp.eq.s32.totalorder %s19, 1
      %p75 = por %p73, %p74
      %p76 = scmp.ne.s32.totalorder %s65, %s66
      %p77 = scmp.eq.s32.totalorder %s19, 0
      %p78 = por %p76, %p77
      %p79 = scmp.ne.s32.totalorder %s65, %s66
      %p80 = scmp.eq.s32.totalorder %s20, 1
      %p81 = por %p79, %p80
      %p83 = scmp.ne.s32.totalorder %s66, %s82
      %p84 = scmp.eq.s32.totalorder %s20, 0
      %p85 = por %p83, %p84
      %s86 = ssub.s32 %s22, %s29
      %p87 = scmp.eq.s32.totalorder %s86, 0
      %s89 = sadd.s32 %s88, 1
      %s90 = scalar_select %p87, %s88, %s89
      %p93 = pneg %p87
      %p94 = scmp.eq.s32.totalorder %s14, 1
      %p95 = por %p93, %p94
      %p96 = scmp.ne.s32.totalorder %s88, %s91
      %p97 = scmp.eq.s32.totalorder %s14, 0
      %p98 = por %p96, %p97
      %p99 = scmp.ne.s32.totalorder %s88, %s91
      %p100 = scmp.eq.s32.totalorder %s19, 1
      %p101 = por %p99, %p100
      %p102 = scmp.ne.s32.totalorder %s91, %s92
      %p103 = scmp.eq.s32.totalorder %s19, 0
      %p104 = por %p102, %p103
      %p105 = scmp.ne.s32.totalorder %s91, %s92
      %p106 = scmp.eq.s32.totalorder %s20, 1
      %p107 = por %p105, %p106
      %p109 = scmp.ne.s32.totalorder %s92, %s108
      %p110 = scmp.eq.s32.totalorder %s20, 0
      %p111 = por %p109, %p110
      %s112 = ssub.s32 %s21, %s33
      %p113 = scmp.eq.s32.totalorder %s112, 0
      %s115 = sadd.s32 %s114, 1
      %s116 = scalar_select %p113, %s114, %s115
      %p119 = pneg %p113
      %p120 = scmp.eq.s32.totalorder %s14, 1
      %p121 = por %p119, %p120
      %p122 = scmp.ne.s32.totalorder %s114, %s117
      %p123 = scmp.eq.s32.totalorder %s14, 0
      %p124 = por %p122, %p123
      %p125 = scmp.ne.s32.totalorder %s114, %s117
      %p126 = scmp.eq.s32.totalorder %s19, 1
      %p127 = por %p125, %p126
      %p128 = scmp.ne.s32.totalorder %s117, %s118
      %p129 = scmp.eq.s32.totalorder %s19, 0
      %p130 = por %p128, %p129
      %p131 = scmp.ne.s32.totalorder %s117, %s118
      %p132 = scmp.eq.s32.totalorder %s20, 1
      %p133 = por %p131, %p132
      %p135 = scmp.ne.s32.totalorder %s118, %s134
      %p136 = scmp.eq.s32.totalorder %s20, 0
      %p137 = por %p135, %p136
      %p138 = scmp.le.s32.totalorder 1, %s14
      %p139 = scmp.lt.s32.totalorder %s14, 3
      %p140 = pnand %p138, %p139
      %p141 = pneg %p140
      // Predicated region
      $region9: #{tpu_custom_call.1} parent=5 // pred_check
        _
      $region10: #{tpu_custom_call.1} parent=5 // pred_check_branch
        %143 = sbr.rel (%p140) target = $region12
      $region11: #{tpu_custom_call.1} parent=5 // pred_region
        %s144 = ssub.s32 %s14, 1
        // Predicated region
        $region13: #{tpu_custom_call.1} parent=11 // pred_check
          %p145 = pneg %p52
        $region14: #{tpu_custom_call.1} parent=11 // pred_check_branch
          %147 = sbr.rel (%p145) target = $region16
        $region15: #{tpu_custom_call.1} parent=11 // pred_region
          %s148 = smul.u32 2, %s23
          %s150 = ssub.s32 128, 128
          %151 = vsyncadd [#allocation6], %s150
          %s152 = smul.addr %s148, 64
          %s153 = scalar_lea.hbm %s0, %s152
          %s154 = sshll.u32 [#allocation5], 4
          %s155 = int_to_ptr.vmem [resolvable:$true] %s154
          %160 = dma.hbm_to_vmem [thread:$0]  %s153, 128, %s155, [#allocation6], 64, 64, 4
        $region16: #{tpu_custom_call.1} parent=11 // pred_fallthru
          _
      $region12: #{tpu_custom_call.1} parent=5 // pred_fallthru
        _
      %p161 = scmp.lt.s32.totalorder %s14, 2
      // Predicated region
      $region17: #{tpu_custom_call.1} parent=5 // pred_check
        %p162 = pneg %p161
      $region18: #{tpu_custom_call.1} parent=5 // pred_check_branch
        %164 = sbr.rel (%p162) target = $region20
      $region19: #{tpu_custom_call.1} parent=5 // pred_region
        // Predicated region
        $region21: #{tpu_custom_call.1} parent=19 // pred_check
          %p165 = pneg %p72
        $region22: #{tpu_custom_call.1} parent=19 // pred_check_branch
          %167 = sbr.rel (%p165) target = $region24
        $region23: #{tpu_custom_call.1} parent=19 // pred_region
          %s168 = sand.u32 %s62, 1
          %s169 = scalar_lea.sflag [#allocation9], %s168
          %s170 = sand.u32 %s62, 1
          %s171 = smul.addr %s170, 16
          %s172 = scalar_lea.vmem [#allocation8], %s171
          %s174 = ssub.s32 256, 256
          %175 = vsyncadd %s169, %s174
          %s176 = smul.addr %s22, 64
          %s177 = scalar_lea.hbm %s1, %s176
          %s178 = sshll.u32 %s172, 4
          %s179 = int_to_ptr.vmem [resolvable:$true] %s178
          %184 = dma.hbm_to_vmem [thread:$0]  %s177, 256, %s179, %s169, 128, 64, 4
        $region24: #{tpu_custom_call.1} parent=19 // pred_fallthru
          _
        // Predicated region
        $region25: #{tpu_custom_call.1} parent=19 // pred_check
          %p185 = pneg %p98
        $region26: #{tpu_custom_call.1} parent=19 // pred_check_branch
          %187 = sbr.rel (%p185) target = $region28
        $region27: #{tpu_custom_call.1} parent=19 // pred_region
          %p188 = scmp.lt.s32.totalorder %s22, 1
          %s189 = scalar_select %p188, %s22, 1
          %s190 = scalar_lea.vmem %s2, %s189
        $region28: #{tpu_custom_call.1} parent=19 // pred_fallthru
          _
      $region20: #{tpu_custom_call.1} parent=5 // pred_fallthru
        _
      %p191 = scmp.le.s32.totalorder 1, %s14
      %p192 = scmp.lt.s32.totalorder %s14, 3
      %p193 = pnand %p191, %p192
      %p194 = pneg %p193
      // Predicated region
      $region29: #{tpu_custom_call.1} parent=5 // pred_check
        _
      $region30: #{tpu_custom_call.1} parent=5 // pred_check_branch
        %196 = sbr.rel (%p193) target = $region32
      $region31: #{tpu_custom_call.1} parent=5 // pred_region
        %s197 = ssub.s32 %s14, 1
        // Predicated region
        $region33: #{tpu_custom_call.1} parent=31 // pred_check
          %p198 = pneg %p52
        $region34: #{tpu_custom_call.1} parent=31 // pred_check_branch
          %200 = sbr.rel (%p198) target = $region36
        $region35: #{tpu_custom_call.1} parent=31 // pred_region
          %201 = dma.done [#allocation6], 128
        $region36: #{tpu_custom_call.1} parent=31 // pred_fallthru
          _
        %s202 = sand.u32 %s65, 1
        %s203 = scalar_lea.sflag [#allocation9], %s202
        %s204 = sand.u32 %s65, 1
        %s205 = smul.addr %s204, 16
        %s206 = scalar_lea.vmem [#allocation8], %s205
        // Predicated region
        $region37: #{tpu_custom_call.1} parent=31 // pred_check
          %p207 = pneg %p78
        $region38: #{tpu_custom_call.1} parent=31 // pred_check_branch
          %209 = sbr.rel (%p207) target = $region40
        $region39: #{tpu_custom_call.1} parent=31 // pred_region
          %210 = dma.done %s203, 256
        $region40: #{tpu_custom_call.1} parent=31 // pred_fallthru
          _
        %p211 = pneg %p52
        %p212 = pneg %p49
        %s213 = sand.u32 %s65, 1
        %s214 = scalar_lea.sflag [#allocation9], %s213
        %s215 = sand.u32 %s65, 1
        %s216 = smul.addr %s215, 16
        %s217 = scalar_lea.vmem [#allocation8], %s216
        %p218 = pneg %p78
        %p219 = pneg %p75
        %p220 = scmp.lt.s32.totalorder %s24, 1
        %s221 = scalar_select %p220, %s24, 1
        %s222 = scalar_lea.vmem %s2, %s221
        %p223 = pneg %p104
        %p224 = pneg %p101
        %p225 = pneg %p130
        %p226 = pneg %p127
        %s227 = smul.u32 2, %s23
        %p228 = scmp.lt.s32.totalorder %s24, 1
        %s229 = scalar_select %p228, %s24, 1
        %s230 = scalar_lea.vmem %s2, %s229
        %s231 = smul.u32 2, %s23
        %p233 = scmp.eq.s32.totalorder %s24, 0
        // Predicated region
        $region41: #{tpu_custom_call.1} parent=31 // pred_check
          %p234 = pneg %p233
        $region42: #{tpu_custom_call.1} parent=31 // pred_check_branch
          %236 = sbr.rel (%p234) target = $region44
        $region43: #{tpu_custom_call.1} parent=31 // pred_region
          %vm237 = vcmask 7168
          %238 = vst.msk [vmem:[#allocation2] sm:$0xff] %vm237, -1e+30
          %239 = vst.msk [vmem:[#allocation2 + $0x8] sm:$0xff] %vm237, -1e+30
          %240 = vst.msk [vmem:[#allocation3] sm:$0xff] %vm237, 0.0
          %241 = vst.msk [vmem:[#allocation3 + $0x8] sm:$0xff] %vm237, 0.0
        $region44: #{tpu_custom_call.1} parent=31 // pred_fallthru
          _
        %v242 = vld [vmem:[#allocation5] sm:$0xf]
        %v243 = vld [vmem:[#allocation5 + $0x4] sm:$0xf]
        %v244 = vld [vmem:[%s206] sm:$0xf]
        %v245 = vld [vmem:[%s206 + $0x4] sm:$0xf]
        %v246 = vld [vmem:[%s206 + $0x8] sm:$0xf]
        %v247 = vld [vmem:[%s206 + $0xc] sm:$0xf]
        %v248 = vld [vmem:[%s230] sm:$0x1]
        %v250 = vlaneseq
        %v251 = vshrl.u32 %v250, 7
        %v252 = vsub.s32 0, %v251
        %v253 = vrot.slane %v248, %v252
        %v257 = vunpack.c.l.b16 %v242
        %v258 = vunpack.c.l.b16 %v243
        %v259 = vpack.c.b16 %v258, %v257
        %v264 = vunpack.c.l.b16 %v244
        %v265 = vunpack.c.l.b16 %v245
        %v266 = vunpack.c.l.b16 %v246
        %v267 = vunpack.c.l.b16 %v247
        %v268 = vpack.c.b16 %v265, %v264
        %v269 = vpack.c.b16 %v267, %v266
        %vm272 = vcmask 261120
        %v274 = vsel %vm272, %v259, 0
        %276 = vmatprep.subr.bf16.mxu0 0
        %277 = vmatpush1.bf16.msra.mxu0 %v268
        %278 = vmatprep.subr.bf16.mxu0 0
        %279 = vmatpush1.bf16.msra.mxu0 %v269
        %280 = vmatprep.subr.bf16.mxu0 0
        %281 = vmatpush1.bf16.msra.mxu0 0
        %282 = vmatprep.subr.bf16.mxu0 0
        %283 = vmatpush1.bf16.msra.mxu0 0
        %284 = vmatprep.subr.bf16.mxu0 0
        %285 = vmatpush1.bf16.msra.mxu0 0
        %286 = vmatprep.subr.bf16.mxu0 0
        %287 = vmatpush1.bf16.msra.mxu0 0
        %288 = vmatprep.subr.bf16.mxu0 0
        %289 = vmatpush1.bf16.msra.mxu0 0
        %290 = vmatprep.subr.bf16.mxu0 0
        %291 = vmatpush1.bf16.msra.mxu0 0
        %292 = vmatprep.subr.bf16.mxu0 0
        %293 = vmatpush1.bf16.msra.mxu0 0
        %294 = vmatprep.subr.bf16.mxu0 0
        %295 = vmatpush1.bf16.msra.mxu0 0
        %296 = vmatprep.subr.bf16.mxu0 0
        %297 = vmatpush1.bf16.msra.mxu0 0
        %298 = vmatprep.subr.bf16.mxu0 0
        %299 = vmatpush1.bf16.msra.mxu0 0
        %300 = vmatprep.subr.bf16.mxu0 0
        %301 = vmatpush1.bf16.msra.mxu0 0
        %302 = vmatprep.subr.bf16.mxu0 0
        %303 = vmatpush1.bf16.msra.mxu0 0
        %304 = vmatprep.subr.bf16.mxu0 0
        %305 = vmatpush1.bf16.msra.mxu0 0
        %306 = vmatprep.subr.bf16.mxu0 0
        %307 = vmatpush1.bf16.msra.mxu0 0
        %308 = vmatprep.mubr.bf16.mxu0 0
        %309 = vmatmul.mubr.bf16.gmra.mrb[0].mxu0 %v274
        %v310 = vpop.f32.mrb[0].mxu0
        %v311 = vadd.f32 %v253, %v310
        %v312 = vpop.f32.mrb[0].mxu0
        %v313 = vpop.f32.mrb[0].mxu0
        %v314 = vadd.f32 %v253, %v313
        %v315 = vpop.f32.mrb[0].mxu0
        %316 = vdwg.mxu0
        %317 = vmax.xlane.f32.xlu0 %v311
        %v318 = vpop.xlane.xlu0 %317
        %319 = vmax.xlane.f32.xlu0 %v314
        %v320 = vpop.xlane.xlu0 %319
        %v321 = vld [vmem:[#allocation2] sm:$0xff]
        %v322 = vld [vmem:[#allocation2 + $0x8] sm:$0xff]
        %v323 = vmax.f32 %v321, %v318
        %v324 = vmax.f32 %v322, %v320
        %v325 = vsub.f32 %v321, %v323
        %v326 = vsub.f32 %v322, %v324
        %v327 = vmul.f32 %v325, 1.442695
        %v328 = vpow.pop %v327
        %v329 = vmul.f32 %v326, 1.442695
        %v330 = vpow.pop %v329
        %v331 = vld [vmem:[#allocation3] sm:$0xff]
        %v332 = vld [vmem:[#allocation3 + $0x8] sm:$0xff]
        %v333 = vmul.f32 %v328, %v331
        %v334 = vmul.f32 %v330, %v332
        %336 = vset.pattern.permute.xlu0 0
        %337 = vperm.xlu0 %336, %v323
        %v338 = vpop.permute.xlu0 %337
        %341 = vset.pattern.permute.xlu0 0
        %342 = vperm.xlu0 %341, %v324
        %v343 = vpop.permute.xlu0 %342
        %v345 = vsub.f32 %v311, %v338
        %v346 = vsub.f32 %v314, %v343
        %v347 = vmul.f32 %v345, 1.442695
        %v348 = vpow.pop %v347
        %v349 = vmul.f32 %v346, 1.442695
        %v350 = vpow.pop %v349
        %351 = vadd.xlane.f32.xlu0 %v348
        %v352 = vpop.xlane.xlu0 %351
        %353 = vadd.xlane.f32.xlu0 %v350
        %v354 = vpop.xlane.xlu0 %353
        %v355 = vadd.f32 %v333, %v352
        %v356 = vadd.f32 %v334, %v354
        %vm357 = vcmask 7168
        %358 = vst.msk [vmem:[#allocation3] sm:$0xff] %vm357, %v355
        %359 = vst.msk [vmem:[#allocation3 + $0x8] sm:$0xff] %vm357, %v356
        %360 = vst.msk [vmem:[#allocation2] sm:$0xff] %vm357, %v323
        %361 = vst.msk [vmem:[#allocation2 + $0x8] sm:$0xff] %vm357, %v324
        %s362 = smul.u32 %s24, 16
        %s363 = scalar_lea.vmem [#allocation4], %s362
        %364 = vst [vmem:[%s363] sm:$0xff] %v311
        %365 = vst [vmem:[%s363 + $0x8] sm:$0xff] %v314
        %p366 = scmp.eq.s32.totalorder %s24, 1
        // Predicated region
        $region45: #{tpu_custom_call.1} parent=31 // pred_check
          %p367 = pneg %p366
        $region46: #{tpu_custom_call.1} parent=31 // pred_check_branch
          %369 = sbr.rel (%p367) target = $region48
        $region47: #{tpu_custom_call.1} parent=31 // pred_region
          %v370 = vld [vmem:[#allocation2] sm:$0xff]
          %v371 = vld [vmem:[#allocation2 + $0x8] sm:$0xff]
          %v372 = vld [vmem:[#allocation3] sm:$0xff]
          %v373 = vld [vmem:[#allocation3 + $0x8] sm:$0xff]
          %v374 = vlog2.pop %v372
          %v375 = vmul.f32 %v374, 0.6931472
          %v376 = vlog2.pop %v373
          %v377 = vmul.f32 %v376, 0.6931472
          %v378 = vadd.f32 %v370, %v375
          %v379 = vadd.f32 %v371, %v377
          %v380 = vld [vmem:[#allocation4] sm:$0xff]
          %v381 = vld [vmem:[#allocation4 + $0x8] sm:$0xff]
          %383 = vset.pattern.permute.xlu0 0
          %384 = vperm.xlu0 %383, %v378
          %v385 = vpop.permute.xlu0 %384
          %388 = vset.pattern.permute.xlu0 0
          %389 = vperm.xlu0 %388, %v379
          %v390 = vpop.permute.xlu0 %389
          %v392 = vsub.f32 %v380, %v385
          %v393 = vsub.f32 %v381, %v390
          %394 = vst [vmem:[#allocation10] sm:$0xff] %v392
          %395 = vst [vmem:[#allocation10 + $0x10] sm:$0xff] %v393
          %s396 = scalar_lea.vmem [#allocation4], 16
          %v397 = vld [vmem:[%s396] sm:$0xff]
          %v398 = vld [vmem:[%s396 + $0x8] sm:$0xff]
          %v399 = vsub.f32 %v397, %v385
          %v400 = vsub.f32 %v398, %v390
          %401 = vst [vmem:[#allocation10 + $0x8] sm:$0xff] %v399
          %402 = vst [vmem:[#allocation10 + $0x18] sm:$0xff] %v400
        $region48: #{tpu_custom_call.1} parent=31 // pred_fallthru
          _
        // Predicated region
        $region49: #{tpu_custom_call.1} parent=31 // pred_check
          %p403 = pneg %p127
        $region50: #{tpu_custom_call.1} parent=31 // pred_check_branch
          %405 = sbr.rel (%p403) target = $region52
        $region51: #{tpu_custom_call.1} parent=31 // pred_region
          %s406 = smul.u32 2, %s23
          %s408 = ssub.s32 512, 512
          %409 = vsyncadd [#allocation7], %s408
          %s410 = smul.addr %s406, 2
          %s411 = smul.addr %s410, 128
          %s412 = scalar_lea.hbm %s3, %s411
          %s413 = sshll.u32 [#allocation10], 4
          %s414 = int_to_ptr.vmem [resolvable:$true] %s413
          %419 = dma.vmem_to_hbm [thread:$0]  %s414, 512, %s412, [#allocation7], 256, 256, 16
        $region52: #{tpu_custom_call.1} parent=31 // pred_fallthru
          _
        // Predicated region
        $region53: #{tpu_custom_call.1} parent=31 // pred_check
          %p420 = pneg %p127
        $region54: #{tpu_custom_call.1} parent=31 // pred_check_branch
          %422 = sbr.rel (%p420) target = $region56
        $region55: #{tpu_custom_call.1} parent=31 // pred_region
          %423 = dma.done [#allocation7], 512
        $region56: #{tpu_custom_call.1} parent=31 // pred_fallthru
          _
      $region32: #{tpu_custom_call.1} parent=5 // pred_fallthru
        _
      %p424 = scmp.le.s32.totalorder 2, %s14
      // Predicated region
      $region57: #{tpu_custom_call.1} parent=5 // pred_check
        %p425 = pneg %p424
      $region58: #{tpu_custom_call.1} parent=5 // pred_check_branch
        %427 = sbr.rel (%p425) target = $region60
      $region59: #{tpu_custom_call.1} parent=5 // pred_region
        %s428 = ssub.s32 %s14, 2
      $region60: #{tpu_custom_call.1} parent=5 // pred_fallthru
        _
    $region6: #{tpu_custom_call.1} parent=1 // loop_footer
      %s18 = sadd.s32 1, %s14
    $region7: #{tpu_custom_call.1} parent=1 // loop_footer_branch
      %13 = sbr.rel target = $region3
    $region8: #{tpu_custom_call.1} parent=1 // loop_exit
      _
    %429 = vsyncpa [#allocation6], 1
    %s430 = scalar_lea.sflag [#allocation6], 1
    %431 = vsyncpa %s430, 1
    %432 = vsyncpa [#allocation9], 1
    %s433 = scalar_lea.sflag [#allocation9], 1
    %434 = vsyncpa %s433, 1
    %435 = vsyncpa [#allocation7], 1
    %s436 = scalar_lea.sflag [#allocation7], 1
    %437 = vsyncpa %s436, 1

</llo_original>
